<compile_context>
chip_gen: v7x
topology: tpu7x:2x2x1
jax: 0.10.0
libtpu: 0.0.40
codegen_flags: <defaults>
</compile_context>

<pallas_src>
import jax
import jax.numpy as jnp
from jax.experimental import pallas as pl
from jax.experimental.pallas import tpu as pltpu


def _round_up(x, m):
    return (x + m - 1) // m * m


def _choose_batch_tile(B, *, cap=1024, min_tile=128, target_steps=4):
    """Large, MXU/HBM-friendly batch tile.

    - multiple of 16 (bf16 sublane packing)
    - whole batch when B is small
    - otherwise aim for ~target_steps grid steps (so the "parallel" axis has
      work for both v7x TensorCores), capped at `cap`
    - prefer a nearby tile that divides B exactly so B_pad == B and the final
      h[:B] / y[:B] slices are views, not copies.
    """
    if B <= 2 * min_tile:
        return _round_up(B, 16)
    tile = _round_up(pl.cdiv(B, target_steps), 16)
    tile = max(min_tile, min(cap, tile))
    lo = max(16, min_tile, tile // 2)
    if B % 16 == 0:
        for cand in range(tile, lo - 1, -16):
            if B % cand == 0:
                return cand
    return tile


def _autoencoder_kernel(x_ref, w1_ref, b1_ref, w3_ref, b3_ref, wr_ref, br_ref,
                        h_ref, y_ref):
    # x arrives in f32; cast to the weights' dtype (bf16) in-kernel, feed the
    # MXU with f32 accumulation, and keep bias-add / ReLU in f32 (v5e has no
    # bf16 VPU path).
    x = x_ref[...].astype(w1_ref.dtype)

    # fc1 + relu
    h1 = jnp.dot(x, w1_ref[...], preferred_element_type=jnp.float32) + b1_ref[...]
    h1 = jnp.maximum(h1, 0.0)

    # fc3 + relu  (re-cast activation to bf16 only to feed the MXU)
    h3 = jnp.dot(h1.astype(w3_ref.dtype), w3_ref[...],
                 preferred_element_type=jnp.float32) + b3_ref[...]
    h3 = jnp.maximum(h3, 0.0)

    # fc_reg (no activation); output columns are padded to a full 128-lane slab
    # so the store is an unmasked, lane-dense vst.
    y = jnp.dot(h3.astype(wr_ref.dtype), wr_ref[...],
                preferred_element_type=jnp.float32) + br_ref[...]

    h_ref[...] = h3.astype(h_ref.dtype)
    y_ref[...] = y.astype(y_ref.dtype)


def prepare_params(raw_params, *, compute_dtype=jnp.bfloat16):
    """One-time parameter prep: cast weights to the MXU compute dtype and pad
    fc_reg's weight/bias out to a 128-lane multiple.  Call once, reuse."""
    w1, b1, w3, b3, wr, br = raw_params
    out_dim = wr.shape[1]
    out_pad = _round_up(out_dim, 128)
    wr_p = jnp.pad(wr, ((0, 0), (0, out_pad - out_dim))).astype(compute_dtype)
    br_p = jnp.pad(br, ((0, 0), (0, out_pad - out_dim))).astype(jnp.float32)
    return (w1.astype(compute_dtype), b1.astype(jnp.float32),
            w3.astype(compute_dtype), b3.astype(jnp.float32),
            wr_p, br_p)


def regression_autoencoder(x, params, *, out_dim, batch_tile=None,
                           out_dtype=jnp.float32,
                           single_buffer_weights=False, x_buffers=None):
    """Fused forward pass.

    x: (B, input_dim) f32.  params: output of prepare_params().
    Returns (h, y_pred) with dtype `out_dtype` (f32 default; bf16 halves the
    dominant write-side HBM traffic if the consumer tolerates it).
    """
    w1, b1, w3, b3, wr, br = params
    B, input_dim = x.shape
    encoding_dim = w1.shape[1]
    out_pad = wr.shape[1]          # already padded to a multiple of 128

    if batch_tile is None:
        batch_tile = _choose_batch_tile(B)
    batch_tile = _round_up(batch_tile, 16)

    B_pad = _round_up(B, batch_tile)
    if B_pad != B:
        # Only pays an extra pad pass when B is not tile-aligned; the tile
        # heuristic above tries hard to avoid this.
        x = jnp.pad(x, ((0, B_pad - B), (0, 0)))

    grid = (B_pad // batch_tile,)

    # Weights/biases fully resident each step (constant block index -> no
    # re-DMA).  Optionally drop the useless second buffer (matters only if
    # input_dim/encoding_dim grow, esp. on v7x's 64 MiB VMEM).
    if single_buffer_weights:
        const = lambda shape: pl.BlockSpec(shape, lambda i: (0, 0),
                                           pipeline_mode=pl.Buffered(1))
    else:
        const = lambda shape: pl.BlockSpec(shape, lambda i: (0, 0))

    # x is the only streamed input; on v5e, bump x_buffers to 3 if profiling
    # shows exposed DMA at large batch tiles.
    if x_buffers is None:
        x_spec = pl.BlockSpec((batch_tile, input_dim), lambda i: (i, 0))
    else:
        x_spec = pl.BlockSpec((batch_tile, input_dim), lambda i: (i, 0),
                              pipeline_mode=pl.Buffered(x_buffers))

    h, y = pl.pallas_call(
        _autoencoder_kernel,
        out_shape=(
            jax.ShapeDtypeStruct((B_pad, input_dim), out_dtype),
            jax.ShapeDtypeStruct((B_pad, out_pad), out_dtype),
        ),
        grid=grid,
        in_specs=[
            x_spec,                                                    # x (f32)
            const((input_dim, encoding_dim)),                          # w1
            const((1, encoding_dim)),                                  # b1
            const((encoding_dim, input_dim)),                          # w3
            const((1, input_dim)),                                     # b3
            const((input_dim, out_pad)),                               # wr (padded)
            const((1, out_pad)),                                       # br (padded)
        ],
        out_specs=(
            pl.BlockSpec((batch_tile, input_dim), lambda i: (i, 0)),   # h
            pl.BlockSpec((batch_tile, out_pad), lambda i: (i, 0)),     # y (padded)
        ),
        compiler_params=pltpu.CompilerParams(
            dimension_semantics=("parallel",),   # shards batch tiles across TCs
        ),
    )(x, w1, b1, w3, b3, wr, br)

    # When B_pad == B these slices are no-ops; y's column slice is tiny.
    # TODO(synk): if h is only consumed by a following fused kernel, keep it in
    # VMEM / alias it instead of round-tripping (B, input_dim) through HBM.
    return h[:B], y[:B, :out_dim]


def init_params(key, input_dim, encoding_dim, out_dim):
    """Deterministic init mimicking nn.Linear's U(-1/sqrt(fan_in), 1/sqrt(fan_in))."""
    ks = jax.random.split(key, 6)

    def linear(kw, kb, fan_in, fan_out):
        bound = 1.0 / jnp.sqrt(fan_in)
        w = jax.random.uniform(kw, (fan_in, fan_out), jnp.float32, -bound, bound)
        b = jax.random.uniform(kb, (1, fan_out), jnp.float32, -bound, bound)
        return w, b

    w1, b1 = linear(ks[0], ks[1], input_dim, encoding_dim)
    w3, b3 = linear(ks[2], ks[3], encoding_dim, input_dim)
    wr, br = linear(ks[4], ks[5], input_dim, out_dim)
    return (w1, b1, w3, b3, wr, br)


def reference_forward_f32(x, params):
    w1, b1, w3, b3, wr, br = params
    h = jnp.maximum(x @ w1 + b1, 0.0)
    h = jnp.maximum(h @ w3 + b3, 0.0)
    y = h @ wr + br
    return h, y


def reference_forward_bf16(x, params):
    """Mirrors the kernel's bf16-MXU / f32-accumulate arithmetic."""
    w1, b1, w3, b3, wr, br = params
    bf = jnp.bfloat16

    def mm(a, w):
        return jnp.dot(a.astype(bf), w.astype(bf),
                       preferred_element_type=jnp.float32)

    h = jnp.maximum(mm(x, w1) + b1, 0.0)
    h = jnp.maximum(mm(h, w3) + b3, 0.0)
    y = mm(h, wr) + br
    return h, y


if __name__ == "__main__":
    # Small shapes consistent with the module (input_dim, encoding_dim, out_dim).
    B, input_dim, encoding_dim, out_dim = 16, 128, 256, 8

    key = jax.random.PRNGKey(0)
    kx, kp = jax.random.split(key)
    x = jax.random.normal(kx, (B, input_dim), jnp.float32)
    raw_params = init_params(kp, input_dim, encoding_dim, out_dim)

    # One-time weight prep (bf16 cast + 128-lane pad of fc_reg).
    params = prepare_params(raw_params)

    fwd = jax.jit(regression_autoencoder,
                  static_argnames=("out_dim", "batch_tile", "out_dtype"))

    # Default path: f32 outputs (matches PyTorch return dtypes).
    h, y = jax.block_until_ready(fwd(x, params, out_dim=out_dim))
    assert h.shape == (B, input_dim) and y.shape == (B, out_dim)

    # Tight check against a reference using the same bf16-MXU arithmetic.
    h_bf, y_bf = reference_forward_bf16(x, raw_params)
    assert jnp.allclose(h, h_bf, atol=1e-2, rtol=1e-2)
    assert jnp.allclose(y, y_bf, atol=1e-2, rtol=1e-2)

    # Loose check against the pure-f32 PyTorch-equivalent reference.
    h_f32, y_f32 = reference_forward_f32(x, raw_params)
    assert jnp.allclose(h, h_f32, atol=5e-2, rtol=5e-2)
    assert jnp.allclose(y, y_f32, atol=5e-2, rtol=5e-2)

    # Exercise the bf16-output knob (halves the write-side HBM traffic).
    h16, y16 = jax.block_until_ready(
        fwd(x, params, out_dim=out_dim, out_dtype=jnp.bfloat16))
    assert h16.dtype == jnp.bfloat16 and y16.dtype == jnp.bfloat16
    assert jnp.allclose(h16.astype(jnp.float32), h, atol=5e-2, rtol=5e-2)
    assert jnp.allclose(y16.astype(jnp.float32), y, atol=5e-2, rtol=5e-2)

    print("KERNEL_OK")
</pallas_src>

<mosaic_0001>
module attributes {stable_mosaic.version = 11 : i64} {
  func.func @_autoencoder_kernel(%arg0: i32, %arg1: memref<16x128xf32, #tpu.memory_space<vmem>>, %arg2: memref<128x256xbf16, #tpu.memory_space<vmem>>, %arg3: memref<1x256xf32, #tpu.memory_space<vmem>>, %arg4: memref<256x128xbf16, #tpu.memory_space<vmem>>, %arg5: memref<1x128xf32, #tpu.memory_space<vmem>>, %arg6: memref<128x128xbf16, #tpu.memory_space<vmem>>, %arg7: memref<1x128xf32, #tpu.memory_space<vmem>>, %arg8: memref<16x128xf32, #tpu.memory_space<vmem>>, %arg9: memref<16x128xf32, #tpu.memory_space<vmem>>) attributes {dimension_semantics = [#tpu.dimension_semantics<parallel>], iteration_bounds = array<i64: 1>, scalar_prefetch = 0 : i64, scratch_operands = 0 : i64, tpu.core_type = #tpu.core_type<tc>, window_params = [{transform_indices = @transform_0, window_bounds = array<i64: 16, 128>}, {pipeline_mode = #tpu.pipeline_mode<synchronous>, transform_indices = @transform_1, window_bounds = array<i64: 128, 256>}, {pipeline_mode = #tpu.pipeline_mode<synchronous>, transform_indices = @transform_2, window_bounds = array<i64: 1, 256>}, {pipeline_mode = #tpu.pipeline_mode<synchronous>, transform_indices = @transform_3, window_bounds = array<i64: 256, 128>}, {pipeline_mode = #tpu.pipeline_mode<synchronous>, transform_indices = @transform_4, window_bounds = array<i64: 1, 128>}, {pipeline_mode = #tpu.pipeline_mode<synchronous>, transform_indices = @transform_5, window_bounds = array<i64: 128, 128>}, {pipeline_mode = #tpu.pipeline_mode<synchronous>, transform_indices = @transform_6, window_bounds = array<i64: 1, 128>}, {transform_indices = @transform_7, window_bounds = array<i64: 16, 128>}, {transform_indices = @transform_8, window_bounds = array<i64: 16, 128>}]} {
    %c0 = arith.constant 0 : index
    %c0_0 = arith.constant 0 : index
    %0 = vector.load %arg1[%c0, %c0_0] : memref<16x128xf32, #tpu.memory_space<vmem>>, vector<16x128xf32>
    %1 = arith.truncf %0 : vector<16x128xf32> to vector<16x128xbf16>
    %c0_1 = arith.constant 0 : index
    %c0_2 = arith.constant 0 : index
    %2 = vector.load %arg2[%c0_1, %c0_2] : memref<128x256xbf16, #tpu.memory_space<vmem>>, vector<128x256xbf16>
    %cst = arith.constant dense<0.000000e+00> : vector<16x256xf32>
    %3 = tpu.matmul %1, %2, %cst {dimension_numbers = #tpu.dot_dimension_numbers<[1], [0], [0], [1], [0, 0, 1, 1], [], []>} : vector<16x128xbf16>, vector<128x256xbf16>, vector<16x256xf32> -> vector<16x256xf32>
    %c0_3 = arith.constant 0 : index
    %c0_4 = arith.constant 0 : index
    %4 = vector.load %arg3[%c0_3, %c0_4] : memref<1x256xf32, #tpu.memory_space<vmem>>, vector<1x256xf32>
    %5 = vector.broadcast %4 : vector<1x256xf32> to vector<16x256xf32>
    %6 = arith.addf %3, %5 : vector<16x256xf32>
    %cst_5 = arith.constant 0.000000e+00 : f32
    %7 = vector.broadcast %cst_5 : f32 to vector<16x256xf32>
    %8 = arith.maximumf %6, %7 : vector<16x256xf32>
    %9 = arith.truncf %8 : vector<16x256xf32> to vector<16x256xbf16>
    %c0_6 = arith.constant 0 : index
    %c0_7 = arith.constant 0 : index
    %10 = vector.load %arg4[%c0_6, %c0_7] : memref<256x128xbf16, #tpu.memory_space<vmem>>, vector<256x128xbf16>
    %cst_8 = arith.constant dense<0.000000e+00> : vector<16x128xf32>
    %11 = tpu.matmul %9, %10, %cst_8 {dimension_numbers = #tpu.dot_dimension_numbers<[1], [0], [0], [1], [0, 0, 1, 1], [], []>} : vector<16x256xbf16>, vector<256x128xbf16>, vector<16x128xf32> -> vector<16x128xf32>
    %c0_9 = arith.constant 0 : index
    %c0_10 = arith.constant 0 : index
    %12 = vector.load %arg5[%c0_9, %c0_10] : memref<1x128xf32, #tpu.memory_space<vmem>>, vector<1x128xf32>
    %13 = vector.broadcast %12 : vector<1x128xf32> to vector<16x128xf32>
    %14 = arith.addf %11, %13 : vector<16x128xf32>
    %cst_11 = arith.constant 0.000000e+00 : f32
    %15 = vector.broadcast %cst_11 : f32 to vector<16x128xf32>
    %16 = arith.maximumf %14, %15 : vector<16x128xf32>
    %17 = arith.truncf %16 : vector<16x128xf32> to vector<16x128xbf16>
    %c0_12 = arith.constant 0 : index
    %c0_13 = arith.constant 0 : index
    %18 = vector.load %arg6[%c0_12, %c0_13] : memref<128x128xbf16, #tpu.memory_space<vmem>>, vector<128x128xbf16>
    %cst_14 = arith.constant dense<0.000000e+00> : vector<16x128xf32>
    %19 = tpu.matmul %17, %18, %cst_14 {dimension_numbers = #tpu.dot_dimension_numbers<[1], [0], [0], [1], [0, 0, 1, 1], [], []>} : vector<16x128xbf16>, vector<128x128xbf16>, vector<16x128xf32> -> vector<16x128xf32>
    %c0_15 = arith.constant 0 : index
    %c0_16 = arith.constant 0 : index
    %20 = vector.load %arg7[%c0_15, %c0_16] : memref<1x128xf32, #tpu.memory_space<vmem>>, vector<1x128xf32>
    %21 = vector.broadcast %20 : vector<1x128xf32> to vector<16x128xf32>
    %22 = arith.addf %19, %21 : vector<16x128xf32>
    %c0_17 = arith.constant 0 : index
    %c0_18 = arith.constant 0 : index
    %23 = vector.load %arg8[%c0_17, %c0_18] : memref<16x128xf32, #tpu.memory_space<vmem>>, vector<16x128xf32>
    tpu.vector_store %arg8[%c0_17, %c0_18], %16 {strides = array<i32>} : memref<16x128xf32, #tpu.memory_space<vmem>>, vector<16x128xf32>,
    %c0_19 = arith.constant 0 : index
    %c0_20 = arith.constant 0 : index
    %24 = vector.load %arg9[%c0_19, %c0_20] : memref<16x128xf32, #tpu.memory_space<vmem>>, vector<16x128xf32>
    tpu.vector_store %arg9[%c0_19, %c0_20], %22 {strides = array<i32>} : memref<16x128xf32, #tpu.memory_space<vmem>>, vector<16x128xf32>,
    return
  }
  func.func @transform_0(%arg0: i32) -> (i32, i32) {
    %c0_i32 = arith.constant 0 : i32
    %c0_i32_0 = arith.constant 0 : i32
    return %arg0, %c0_i32 : i32, i32
  }
  func.func @transform_1(%arg0: i32) -> (i32, i32) {
    %c0_i32 = arith.constant 0 : i32
    %c0_i32_0 = arith.constant 0 : i32
    %c0_i32_1 = arith.constant 0 : i32
    return %c0_i32, %c0_i32_0 : i32, i32
  }
  func.func @transform_2(%arg0: i32) -> (i32, i32) {
    %c0_i32 = arith.constant 0 : i32
    %c0_i32_0 = arith.constant 0 : i32
    %c0_i32_1 = arith.constant 0 : i32
    return %c0_i32, %c0_i32_0 : i32, i32
  }
  func.func @transform_3(%arg0: i32) -> (i32, i32) {
    %c0_i32 = arith.constant 0 : i32
    %c0_i32_0 = arith.constant 0 : i32
    %c0_i32_1 = arith.constant 0 : i32
    return %c0_i32, %c0_i32_0 : i32, i32
  }
  func.func @transform_4(%arg0: i32) -> (i32, i32) {
    %c0_i32 = arith.constant 0 : i32
    %c0_i32_0 = arith.constant 0 : i32
    %c0_i32_1 = arith.constant 0 : i32
    return %c0_i32, %c0_i32_0 : i32, i32
  }
  func.func @transform_5(%arg0: i32) -> (i32, i32) {
    %c0_i32 = arith.constant 0 : i32
    %c0_i32_0 = arith.constant 0 : i32
    %c0_i32_1 = arith.constant 0 : i32
    return %c0_i32, %c0_i32_0 : i32, i32
  }
  func.func @transform_6(%arg0: i32) -> (i32, i32) {
    %c0_i32 = arith.constant 0 : i32
    %c0_i32_0 = arith.constant 0 : i32
    %c0_i32_1 = arith.constant 0 : i32
    return %c0_i32, %c0_i32_0 : i32, i32
  }
  func.func @transform_7(%arg0: i32) -> (i32, i32) {
    %c0_i32 = arith.constant 0 : i32
    %c0_i32_0 = arith.constant 0 : i32
    return %arg0, %c0_i32 : i32, i32
  }
  func.func @transform_8(%arg0: i32) -> (i32, i32) {
    %c0_i32 = arith.constant 0 : i32
    %c0_i32_0 = arith.constant 0 : i32
    return %arg0, %c0_i32 : i32, i32
  }
}

</mosaic_0001>

<llo_original>
// kernel: regression_autoencoder.1
$region0: #{regression_autoencoder.1}
  #allocation0 [shape = 'u32[]', space=smem, size = 0x4, offset = 0x4, fixed_abs, tag = 'smem constant byte address 0x4 - core index']
  #allocation1 [shape = 'u32[144,128]{1,0:T(1,128)}', space=vmem, size = 0x12000, scoped, tag = 'internal scratch']
  %s0 = inlined_call_operand.hbm [shape: f32[16,128], index: 0, kind: input, shape index: {}]
  %s1 = inlined_call_operand.hbm [shape: bf16[128,256], index: 1, kind: input, shape index: {}]
  %s2 = inlined_call_operand.vmem [shape: f32[1,256], index: 2, kind: input, shape index: {}]
  %s3 = inlined_call_operand.hbm [shape: bf16[256,128], index: 3, kind: input, shape index: {}]
  %s4 = inlined_call_operand.vmem [shape: f32[1,128], index: 4, kind: input, shape index: {}]
  %s5 = inlined_call_operand.hbm [shape: bf16[128,128], index: 5, kind: input, shape index: {}]
  %s6 = inlined_call_operand.vmem [shape: f32[1,128], index: 6, kind: input, shape index: {}]
  %s7 = inlined_call_operand.hbm [shape: f32[16,128], index: 7, kind: output, shape index: {0}]
  %s8 = inlined_call_operand.vmem [shape: f32[16,128], index: 8, kind: output, shape index: {1}]
  %9 = xla_tuple %s7, %s8
  %s10 = sld [smem:[#allocation0]]
  $region62: #{regression_autoencoder.1} parent=0
    _
  %s12 = ssub.s32 1, %s10
  %s13 = scalar_select 0, %s12, %s10
  $region1: #{regression_autoencoder.1} parent=0
    #allocation2 [shape = 'u8[8192]{0}', space=vmem, size = 0x2000, scoped, tag = 'input window, operand 0, single buffered']
    #allocation3 [shape = 's32[1]{0}', space=sflag, size = 0x4, scoped, tag = 'scoped memory for regression_autoencoder.1']
    #allocation4 [shape = 's32[1]{0}', space=sflag, size = 0x4, scoped, tag = 'scoped memory for regression_autoencoder.1']
    #allocation5 [shape = 'u8[65536]{0}', space=vmem, size = 0x10000, scoped, tag = 'input window, operand 1, single buffered']
    #allocation6 [shape = 's32[1]{0}', space=sflag, size = 0x4, scoped, tag = 'scoped memory for regression_autoencoder.1']
    #allocation7 [shape = 'u8[65536]{0}', space=vmem, size = 0x10000, scoped, tag = 'input window, operand 3, single buffered']
    #allocation8 [shape = 'u8[32768]{0}', space=vmem, size = 0x8000, scoped, tag = 'input window, operand 5, single buffered']
    #allocation9 [shape = 's32[1]{0}', space=sflag, size = 0x4, scoped, tag = 'scoped memory for regression_autoencoder.1']
    #allocation10 [shape = 'u8[8192]{0}', space=vmem, size = 0x2000, scoped, tag = 'output window, operand 0, single buffered']
    %14 = vsyncpa [#allocation3], 0
    %15 = vsyncpa [#allocation6], 0
    %16 = vsyncpa [#allocation9], 0
    %17 = vsyncpa [#allocation4], 0
    // Predicated region
    $region2: #{regression_autoencoder.1} parent=1 // pred_check
      _
    $region3: #{regression_autoencoder.1} parent=1 // pred_check_branch
      %19 = sbr.rel (0) target = $region5
    $region4: #{regression_autoencoder.1} parent=1 // pred_region
      %s21 = ssub.s32 256, 256
      %22 = vsyncadd [#allocation3], %s21
      %s23 = sshll.u32 [#allocation2], 4
      %s24 = int_to_ptr.vmem [resolvable:$true] %s23
      %29 = dma.hbm_to_vmem [thread:$0]  %s0, 256, %s24, [#allocation3], 128, 128, 8
    $region5: #{regression_autoencoder.1} parent=1 // pred_fallthru
      _
    // Predicated region
    $region6: #{regression_autoencoder.1} parent=1 // pred_check
      _
    $region7: #{regression_autoencoder.1} parent=1 // pred_check_branch
      %31 = sbr.rel (0) target = $region9
    $region8: #{regression_autoencoder.1} parent=1 // pred_region
      %s33 = ssub.s32 2048, 2048
      %34 = vsyncadd [#allocation6], %s33
      %s35 = sshll.u32 [#allocation5], 4
      %s36 = int_to_ptr.vmem [resolvable:$true] %s35
      %41 = dma.hbm_to_vmem [thread:$0]  %s1, 2048, %s36, [#allocation6], 128, 128, 8
    $region9: #{regression_autoencoder.1} parent=1 // pred_fallthru
      _
    // Predicated region
    $region10: #{regression_autoencoder.1} parent=1 // pred_check
      _
    $region11: #{regression_autoencoder.1} parent=1 // pred_check_branch
      %43 = sbr.rel (0) target = $region13
    $region12: #{regression_autoencoder.1} parent=1 // pred_region
      _
    $region13: #{regression_autoencoder.1} parent=1 // pred_fallthru
      _
    // Predicated region
    $region14: #{regression_autoencoder.1} parent=1 // pred_check
      _
    $region15: #{regression_autoencoder.1} parent=1 // pred_check_branch
      %45 = sbr.rel (0) target = $region17
    $region16: #{regression_autoencoder.1} parent=1 // pred_region
      %s47 = ssub.s32 2048, 2048
      %48 = vsyncadd [#allocation6], %s47
      %s49 = sshll.u32 [#allocation7], 4
      %s50 = int_to_ptr.vmem [resolvable:$true] %s49
      %55 = dma.hbm_to_vmem [thread:$0]  %s3, 2048, %s50, [#allocation6], 64, 64, 4
    $region17: #{regression_autoencoder.1} parent=1 // pred_fallthru
      _
    // Predicated region
    $region18: #{regression_autoencoder.1} parent=1 // pred_check
      _
    $region19: #{regression_autoencoder.1} parent=1 // pred_check_branch
      %57 = sbr.rel (0) target = $region21
    $region20: #{regression_autoencoder.1} parent=1 // pred_region
      _
    $region21: #{regression_autoencoder.1} parent=1 // pred_fallthru
      _
    // Predicated region
    $region22: #{regression_autoencoder.1} parent=1 // pred_check
      _
    $region23: #{regression_autoencoder.1} parent=1 // pred_check_branch
      %59 = sbr.rel (0) target = $region25
    $region24: #{regression_autoencoder.1} parent=1 // pred_region
      %s61 = ssub.s32 1024, 1024
      %62 = vsyncadd [#allocation9], %s61
      %s63 = sshll.u32 [#allocation8], 4
      %s64 = int_to_ptr.vmem [resolvable:$true] %s63
      %69 = dma.hbm_to_vmem [thread:$0]  %s5, 1024, %s64, [#allocation9], 64, 64, 4
    $region25: #{regression_autoencoder.1} parent=1 // pred_fallthru
      _
    // Predicated region
    $region26: #{regression_autoencoder.1} parent=1 // pred_check
      _
    $region27: #{regression_autoencoder.1} parent=1 // pred_check_branch
      %71 = sbr.rel (0) target = $region29
    $region28: #{regression_autoencoder.1} parent=1 // pred_region
      _
    $region29: #{regression_autoencoder.1} parent=1 // pred_fallthru
      _
    // Predicated region
    $region30: #{regression_autoencoder.1} parent=1 // pred_check
      _
    $region31: #{regression_autoencoder.1} parent=1 // pred_check_branch
      %73 = sbr.rel (0) target = $region33
    $region32: #{regression_autoencoder.1} parent=1 // pred_region
      %74 = dma.done [#allocation3], 256
    $region33: #{regression_autoencoder.1} parent=1 // pred_fallthru
      _
    // Predicated region
    $region34: #{regression_autoencoder.1} parent=1 // pred_check
      _
    $region35: #{regression_autoencoder.1} parent=1 // pred_check_branch
      %76 = sbr.rel (0) target = $region37
    $region36: #{regression_autoencoder.1} parent=1 // pred_region
      %77 = dma.done [#allocation6], 2048
    $region37: #{regression_autoencoder.1} parent=1 // pred_fallthru
      _
    // Predicated region
    $region38: #{regression_autoencoder.1} parent=1 // pred_check
      _
    $region39: #{regression_autoencoder.1} parent=1 // pred_check_branch
      %79 = sbr.rel (0) target = $region41
    $region40: #{regression_autoencoder.1} parent=1 // pred_region
      %80 = dma.done [#allocation6], 2048
    $region41: #{regression_autoencoder.1} parent=1 // pred_fallthru
      _
    // Predicated region
    $region42: #{regression_autoencoder.1} parent=1 // pred_check
      _
    $region43: #{regression_autoencoder.1} parent=1 // pred_check_branch
      %82 = sbr.rel (0) target = $region45
    $region44: #{regression_autoencoder.1} parent=1 // pred_region
      %83 = dma.done [#allocation9], 1024
    $region45: #{regression_autoencoder.1} parent=1 // pred_fallthru
      _
    %v85 = vld [vmem:[#allocation2] sm:$0xff]
    %v86 = vld [vmem:[#allocation2 + $0x8] sm:$0xff]
    %v87 = vpack.c.bf16 %v86, %v85
    %v88 = vld [vmem:[#allocation5] sm:$0xff]
    %v89 = vld [vmem:[#allocation5 + $0x8] sm:$0xff]
    %v90 = vld [vmem:[#allocation5 + $0x10] sm:$0xff]
    %v91 = vld [vmem:[#allocation5 + $0x18] sm:$0xff]
    %v92 = vld [vmem:[#allocation5 + $0x20] sm:$0xff]
    %v93 = vld [vmem:[#allocation5 + $0x28] sm:$0xff]
    %v94 = vld [vmem:[#allocation5 + $0x30] sm:$0xff]
    %v95 = vld [vmem:[#allocation5 + $0x38] sm:$0xff]
    %v96 = vld [vmem:[#allocation5 + $0x40] sm:$0xff]
    %v97 = vld [vmem:[#allocation5 + $0x48] sm:$0xff]
    %v98 = vld [vmem:[#allocation5 + $0x50] sm:$0xff]
    %v99 = vld [vmem:[#allocation5 + $0x58] sm:$0xff]
    %v100 = vld [vmem:[#allocation5 + $0x60] sm:$0xff]
    %v101 = vld [vmem:[#allocation5 + $0x68] sm:$0xff]
    %v102 = vld [vmem:[#allocation5 + $0x70] sm:$0xff]
    %v103 = vld [vmem:[#allocation5 + $0x78] sm:$0xff]
    %v104 = vld [vmem:[%s2] sm:$0x3]
    %v106 = vlaneseq
    %v107 = vshrl.u32 %v106, 7
    %v108 = vsub.s32 0, %v107
    %v109 = vrot.slane %v104, %v108
    %v110 = vlaneseq
    %v111 = vshrl.u32 %v110, 7
    %v112 = vsub.s32 1, %v111
    %v113 = vrot.slane %v104, %v112
    %v132 = vunpack.c.l.b16 %v88
    %v133 = vunpack.c.h.b16 %v88
    %v134 = vunpack.c.l.b16 %v89
    %v135 = vunpack.c.h.b16 %v89
    %v136 = vunpack.c.l.b16 %v90
    %v137 = vunpack.c.h.b16 %v90
    %v138 = vunpack.c.l.b16 %v91
    %v139 = vunpack.c.h.b16 %v91
    %v140 = vunpack.c.l.b16 %v92
    %v141 = vunpack.c.h.b16 %v92
    %v142 = vunpack.c.l.b16 %v93
    %v143 = vunpack.c.h.b16 %v93
    %v144 = vunpack.c.l.b16 %v94
    %v145 = vunpack.c.h.b16 %v94
    %v146 = vunpack.c.l.b16 %v95
    %v147 = vunpack.c.h.b16 %v95
    %v148 = vunpack.c.l.b16 %v96
    %v149 = vunpack.c.h.b16 %v96
    %v150 = vunpack.c.l.b16 %v97
    %v151 = vunpack.c.h.b16 %v97
    %v152 = vunpack.c.l.b16 %v98
    %v153 = vunpack.c.h.b16 %v98
    %v154 = vunpack.c.l.b16 %v99
    %v155 = vunpack.c.h.b16 %v99
    %v156 = vunpack.c.l.b16 %v100
    %v157 = vunpack.c.h.b16 %v100
    %v158 = vunpack.c.l.b16 %v101
    %v159 = vunpack.c.h.b16 %v101
    %v160 = vunpack.c.l.b16 %v102
    %v161 = vunpack.c.h.b16 %v102
    %v162 = vunpack.c.l.b16 %v103
    %v163 = vunpack.c.h.b16 %v103
    %v164 = vpack.c.b16 %v134, %v132
    %v165 = vpack.c.b16 %v135, %v133
    %v166 = vpack.c.b16 %v138, %v136
    %v167 = vpack.c.b16 %v139, %v137
    %v168 = vpack.c.b16 %v142, %v140
    %v169 = vpack.c.b16 %v143, %v141
    %v170 = vpack.c.b16 %v146, %v144
    %v171 = vpack.c.b16 %v147, %v145
    %v172 = vpack.c.b16 %v150, %v148
    %v173 = vpack.c.b16 %v151, %v149
    %v174 = vpack.c.b16 %v154, %v152
    %v175 = vpack.c.b16 %v155, %v153
    %v176 = vpack.c.b16 %v158, %v156
    %v177 = vpack.c.b16 %v159, %v157
    %v178 = vpack.c.b16 %v162, %v160
    %v179 = vpack.c.b16 %v163, %v161
    %196 = vmatprep.subr.bf16.mxu0 %v165
    %197 = vmatpush1.bf16.msra.mxu0 %v164
    %198 = vmatprep.subr.bf16.mxu0 %v167
    %199 = vmatpush1.bf16.msra.mxu0 %v166
    %200 = vmatprep.subr.bf16.mxu0 %v169
    %201 = vmatpush1.bf16.msra.mxu0 %v168
    %202 = vmatprep.subr.bf16.mxu0 %v171
    %203 = vmatpush1.bf16.msra.mxu0 %v170
    %204 = vmatprep.subr.bf16.mxu0 %v173
    %205 = vmatpush1.bf16.msra.mxu0 %v172
    %206 = vmatprep.subr.bf16.mxu0 %v175
    %207 = vmatpush1.bf16.msra.mxu0 %v174
    %208 = vmatprep.subr.bf16.mxu0 %v177
    %209 = vmatpush1.bf16.msra.mxu0 %v176
    %210 = vmatprep.subr.bf16.mxu0 %v179
    %211 = vmatpush1.bf16.msra.mxu0 %v178
    %212 = vmatprep.subr.bf16.mxu0 0
    %213 = vmatpush1.bf16.msra.mxu0 0
    %214 = vmatprep.subr.bf16.mxu0 0
    %215 = vmatpush1.bf16.msra.mxu0 0
    %216 = vmatprep.subr.bf16.mxu0 0
    %217 = vmatpush1.bf16.msra.mxu0 0
    %218 = vmatprep.subr.bf16.mxu0 0
    %219 = vmatpush1.bf16.msra.mxu0 0
    %220 = vmatprep.subr.bf16.mxu0 0
    %221 = vmatpush1.bf16.msra.mxu0 0
    %222 = vmatprep.subr.bf16.mxu0 0
    %223 = vmatpush1.bf16.msra.mxu0 0
    %224 = vmatprep.subr.bf16.mxu0 0
    %225 = vmatpush1.bf16.msra.mxu0 0
    %226 = vmatprep.subr.bf16.mxu0 0
    %227 = vmatpush1.bf16.msra.mxu0 0
    %228 = vmatprep.mubr.bf16.mxu0 0
    %229 = vmatmul.mubr.bf16.gmra.mrb[0].mxu0 %v87
    %v230 = vpop.f32.mrb[0].mxu0
    %v231 = vadd.f32 %v109, %v230
    %v232 = vpop.f32.mrb[0].mxu0
    %v233 = vadd.f32 %v113, %v232
    %v234 = vpop.f32.mrb[0].mxu0
    %v235 = vadd.f32 %v109, %v234
    %v236 = vpop.f32.mrb[0].mxu0
    %v237 = vadd.f32 %v113, %v236
    %238 = vdwg.mxu0
    %v239 = vmax.f32 %v231, 0.0
    %v240 = vmax.f32 %v233, 0.0
    %v241 = vmax.f32 %v235, 0.0
    %v242 = vmax.f32 %v237, 0.0
    %v243 = vpack.c.bf16 %v241, %v239
    %v244 = vpack.c.bf16 %v242, %v240
    %v245 = vld [vmem:[#allocation7] sm:$0xf]
    %v246 = vld [vmem:[#allocation7 + $0x4] sm:$0xf]
    %v247 = vld [vmem:[#allocation7 + $0x8] sm:$0xf]
    %v248 = vld [vmem:[#allocation7 + $0xc] sm:$0xf]
    %v249 = vld [vmem:[#allocation7 + $0x10] sm:$0xf]
    %v250 = vld [vmem:[#allocation7 + $0x14] sm:$0xf]
    %v251 = vld [vmem:[#allocation7 + $0x18] sm:$0xf]
    %v252 = vld [vmem:[#allocation7 + $0x1c] sm:$0xf]
    %v253 = vld [vmem:[#allocation7 + $0x20] sm:$0xf]
    %v254 = vld [vmem:[#allocation7 + $0x24] sm:$0xf]
    %v255 = vld [vmem:[#allocation7 + $0x28] sm:$0xf]
    %v256 = vld [vmem:[#allocation7 + $0x2c] sm:$0xf]
    %v257 = vld [vmem:[#allocation7 + $0x30] sm:$0xf]
    %v258 = vld [vmem:[#allocation7 + $0x34] sm:$0xf]
    %v259 = vld [vmem:[#allocation7 + $0x38] sm:$0xf]
    %v260 = vld [vmem:[#allocation7 + $0x3c] sm:$0xf]
    %v261 = vld [vmem:[#allocation7 + $0x40] sm:$0xf]
    %v262 = vld [vmem:[#allocation7 + $0x44] sm:$0xf]
    %v263 = vld [vmem:[#allocation7 + $0x48] sm:$0xf]
    %v264 = vld [vmem:[#allocation7 + $0x4c] sm:$0xf]
    %v265 = vld [vmem:[#allocation7 + $0x50] sm:$0xf]
    %v266 = vld [vmem:[#allocation7 + $0x54] sm:$0xf]
    %v267 = vld [vmem:[#allocation7 + $0x58] sm:$0xf]
    %v268 = vld [vmem:[#allocation7 + $0x5c] sm:$0xf]
    %v269 = vld [vmem:[#allocation7 + $0x60] sm:$0xf]
    %v270 = vld [vmem:[#allocation7 + $0x64] sm:$0xf]
    %v271 = vld [vmem:[#allocation7 + $0x68] sm:$0xf]
    %v272 = vld [vmem:[#allocation7 + $0x6c] sm:$0xf]
    %v273 = vld [vmem:[#allocation7 + $0x70] sm:$0xf]
    %v274 = vld [vmem:[#allocation7 + $0x74] sm:$0xf]
    %v275 = vld [vmem:[#allocation7 + $0x78] sm:$0xf]
    %v276 = vld [vmem:[#allocation7 + $0x7c] sm:$0xf]
    %v277 = vld [vmem:[%s4] sm:$0x1]
    %v279 = vlaneseq
    %v280 = vshrl.u32 %v279, 7
    %v281 = vsub.s32 0, %v280
    %v282 = vrot.slane %v277, %v281
    %v316 = vunpack.c.l.b16 %v245
    %v317 = vunpack.c.l.b16 %v246
    %v318 = vunpack.c.l.b16 %v247
    %v319 = vunpack.c.l.b16 %v248
    %v320 = vunpack.c.l.b16 %v249
    %v321 = vunpack.c.l.b16 %v250
    %v322 = vunpack.c.l.b16 %v251
    %v323 = vunpack.c.l.b16 %v252
    %v324 = vunpack.c.l.b16 %v253
    %v325 = vunpack.c.l.b16 %v254
    %v326 = vunpack.c.l.b16 %v255
    %v327 = vunpack.c.l.b16 %v256
    %v328 = vunpack.c.l.b16 %v257
    %v329 = vunpack.c.l.b16 %v258
    %v330 = vunpack.c.l.b16 %v259
    %v331 = vunpack.c.l.b16 %v260
    %v332 = vunpack.c.l.b16 %v261
    %v333 = vunpack.c.l.b16 %v262
    %v334 = vunpack.c.l.b16 %v263
    %v335 = vunpack.c.l.b16 %v264
    %v336 = vunpack.c.l.b16 %v265
    %v337 = vunpack.c.l.b16 %v266
    %v338 = vunpack.c.l.b16 %v267
    %v339 = vunpack.c.l.b16 %v268
    %v340 = vunpack.c.l.b16 %v269
    %v341 = vunpack.c.l.b16 %v270
    %v342 = vunpack.c.l.b16 %v271
    %v343 = vunpack.c.l.b16 %v272
    %v344 = vunpack.c.l.b16 %v273
    %v345 = vunpack.c.l.b16 %v274
    %v346 = vunpack.c.l.b16 %v275
    %v347 = vunpack.c.l.b16 %v276
    %v348 = vpack.c.b16 %v317, %v316
    %v349 = vpack.c.b16 %v319, %v318
    %v350 = vpack.c.b16 %v321, %v320
    %v351 = vpack.c.b16 %v323, %v322
    %v352 = vpack.c.b16 %v325, %v324
    %v353 = vpack.c.b16 %v327, %v326
    %v354 = vpack.c.b16 %v329, %v328
    %v355 = vpack.c.b16 %v331, %v330
    %v356 = vpack.c.b16 %v333, %v332
    %v357 = vpack.c.b16 %v335, %v334
    %v358 = vpack.c.b16 %v337, %v336
    %v359 = vpack.c.b16 %v339, %v338
    %v360 = vpack.c.b16 %v341, %v340
    %v361 = vpack.c.b16 %v343, %v342
    %v362 = vpack.c.b16 %v345, %v344
    %v363 = vpack.c.b16 %v347, %v346
    %380 = vmatprep.subr.bf16.mxu0 0
    %381 = vmatpush1.bf16.msra.mxu0 %v348
    %382 = vmatprep.subr.bf16.mxu0 0
    %383 = vmatpush1.bf16.msra.mxu0 %v349
    %384 = vmatprep.subr.bf16.mxu0 0
    %385 = vmatpush1.bf16.msra.mxu0 %v350
    %386 = vmatprep.subr.bf16.mxu0 0
    %387 = vmatpush1.bf16.msra.mxu0 %v351
    %388 = vmatprep.subr.bf16.mxu0 0
    %389 = vmatpush1.bf16.msra.mxu0 %v352
    %390 = vmatprep.subr.bf16.mxu0 0
    %391 = vmatpush1.bf16.msra.mxu0 %v353
    %392 = vmatprep.subr.bf16.mxu0 0
    %393 = vmatpush1.bf16.msra.mxu0 %v354
    %394 = vmatprep.subr.bf16.mxu0 0
    %395 = vmatpush1.bf16.msra.mxu0 %v355
    %396 = vmatprep.subr.bf16.mxu0 0
    %397 = vmatpush1.bf16.msra.mxu0 %v356
    %398 = vmatprep.subr.bf16.mxu0 0
    %399 = vmatpush1.bf16.msra.mxu0 %v357
    %400 = vmatprep.subr.bf16.mxu0 0
    %401 = vmatpush1.bf16.msra.mxu0 %v358
    %402 = vmatprep.subr.bf16.mxu0 0
    %403 = vmatpush1.bf16.msra.mxu0 %v359
    %404 = vmatprep.subr.bf16.mxu0 0
    %405 = vmatpush1.bf16.msra.mxu0 %v360
    %406 = vmatprep.subr.bf16.mxu0 0
    %407 = vmatpush1.bf16.msra.mxu0 %v361
    %408 = vmatprep.subr.bf16.mxu0 0
    %409 = vmatpush1.bf16.msra.mxu0 %v362
    %410 = vmatprep.subr.bf16.mxu0 0
    %411 = vmatpush1.bf16.msra.mxu0 %v363
    %412 = vmatprep.mubr.bf16.mxu0 %v244
    %413 = vmatmul.mubr.bf16.gmra.mrb[0].mxu0 %v243
    %v414 = vpop.f32.mrb[0].mxu0
    %v415 = vadd.f32 %v282, %v414
    %v416 = vpop.f32.mrb[0].mxu0
    %v417 = vpop.f32.mrb[0].mxu0
    %v418 = vadd.f32 %v282, %v417
    %v419 = vpop.f32.mrb[0].mxu0
    %420 = vdwg.mxu0
    %v421 = vmax.f32 %v415, 0.0
    %v422 = vmax.f32 %v418, 0.0
    %v423 = vpack.c.bf16 %v422, %v421
    %v424 = vld [vmem:[#allocation8] sm:$0xf]
    %v425 = vld [vmem:[#allocation8 + $0x4] sm:$0xf]
    %v426 = vld [vmem:[#allocation8 + $0x8] sm:$0xf]
    %v427 = vld [vmem:[#allocation8 + $0xc] sm:$0xf]
    %v428 = vld [vmem:[#allocation8 + $0x10] sm:$0xf]
    %v429 = vld [vmem:[#allocation8 + $0x14] sm:$0xf]
    %v430 = vld [vmem:[#allocation8 + $0x18] sm:$0xf]
    %v431 = vld [vmem:[#allocation8 + $0x1c] sm:$0xf]
    %v432 = vld [vmem:[#allocation8 + $0x20] sm:$0xf]
    %v433 = vld [vmem:[#allocation8 + $0x24] sm:$0xf]
    %v434 = vld [vmem:[#allocation8 + $0x28] sm:$0xf]
    %v435 = vld [vmem:[#allocation8 + $0x2c] sm:$0xf]
    %v436 = vld [vmem:[#allocation8 + $0x30] sm:$0xf]
    %v437 = vld [vmem:[#allocation8 + $0x34] sm:$0xf]
    %v438 = vld [vmem:[#allocation8 + $0x38] sm:$0xf]
    %v439 = vld [vmem:[#allocation8 + $0x3c] sm:$0xf]
    %v440 = vld [vmem:[%s6] sm:$0x1]
    %v442 = vlaneseq
    %v443 = vshrl.u32 %v442, 7
    %v444 = vsub.s32 0, %v443
    %v445 = vrot.slane %v440, %v444
    %v463 = vunpack.c.l.b16 %v424
    %v464 = vunpack.c.l.b16 %v425
    %v465 = vunpack.c.l.b16 %v426
    %v466 = vunpack.c.l.b16 %v427
    %v467 = vunpack.c.l.b16 %v428
    %v468 = vunpack.c.l.b16 %v429
    %v469 = vunpack.c.l.b16 %v430
    %v470 = vunpack.c.l.b16 %v431
    %v471 = vunpack.c.l.b16 %v432
    %v472 = vunpack.c.l.b16 %v433
    %v473 = vunpack.c.l.b16 %v434
    %v474 = vunpack.c.l.b16 %v435
    %v475 = vunpack.c.l.b16 %v436
    %v476 = vunpack.c.l.b16 %v437
    %v477 = vunpack.c.l.b16 %v438
    %v478 = vunpack.c.l.b16 %v439
    %v479 = vpack.c.b16 %v464, %v463
    %v480 = vpack.c.b16 %v466, %v465
    %v481 = vpack.c.b16 %v468, %v467
    %v482 = vpack.c.b16 %v470, %v469
    %v483 = vpack.c.b16 %v472, %v471
    %v484 = vpack.c.b16 %v474, %v473
    %v485 = vpack.c.b16 %v476, %v475
    %v486 = vpack.c.b16 %v478, %v477
    %495 = vmatprep.subr.bf16.mxu0 0
    %496 = vmatpush1.bf16.msra.mxu0 %v479
    %497 = vmatprep.subr.bf16.mxu0 0
    %498 = vmatpush1.bf16.msra.mxu0 %v480
    %499 = vmatprep.subr.bf16.mxu0 0
    %500 = vmatpush1.bf16.msra.mxu0 %v481
    %501 = vmatprep.subr.bf16.mxu0 0
    %502 = vmatpush1.bf16.msra.mxu0 %v482
    %503 = vmatprep.subr.bf16.mxu0 0
    %504 = vmatpush1.bf16.msra.mxu0 %v483
    %505 = vmatprep.subr.bf16.mxu0 0
    %506 = vmatpush1.bf16.msra.mxu0 %v484
    %507 = vmatprep.subr.bf16.mxu0 0
    %508 = vmatpush1.bf16.msra.mxu0 %v485
    %509 = vmatprep.subr.bf16.mxu0 0
    %510 = vmatpush1.bf16.msra.mxu0 %v486
    %511 = vmatprep.subr.bf16.mxu0 0
    %512 = vmatpush1.bf16.msra.mxu0 0
    %513 = vmatprep.subr.bf16.mxu0 0
    %514 = vmatpush1.bf16.msra.mxu0 0
    %515 = vmatprep.subr.bf16.mxu0 0
    %516 = vmatpush1.bf16.msra.mxu0 0
    %517 = vmatprep.subr.bf16.mxu0 0
    %518 = vmatpush1.bf16.msra.mxu0 0
    %519 = vmatprep.subr.bf16.mxu0 0
    %520 = vmatpush1.bf16.msra.mxu0 0
    %521 = vmatprep.subr.bf16.mxu0 0
    %522 = vmatpush1.bf16.msra.mxu0 0
    %523 = vmatprep.subr.bf16.mxu0 0
    %524 = vmatpush1.bf16.msra.mxu0 0
    %525 = vmatprep.subr.bf16.mxu0 0
    %526 = vmatpush1.bf16.msra.mxu0 0
    %527 = vmatprep.mubr.bf16.mxu0 0
    %528 = vmatmul.mubr.bf16.gmra.mrb[0].mxu0 %v423
    %v529 = vpop.f32.mrb[0].mxu0
    %v530 = vadd.f32 %v445, %v529
    %v531 = vpop.f32.mrb[0].mxu0
    %v532 = vpop.f32.mrb[0].mxu0
    %v533 = vadd.f32 %v445, %v532
    %v534 = vpop.f32.mrb[0].mxu0
    %535 = vdwg.mxu0
    %536 = vst [vmem:[#allocation10] sm:$0xff] %v421
    %537 = vst [vmem:[#allocation10 + $0x8] sm:$0xff] %v422
    %538 = vst [vmem:[%s8] sm:$0xff] %v530
    %539 = vst [vmem:[%s8 + $0x8] sm:$0xff] %v533
    // Predicated region
    $region46: #{regression_autoencoder.1} parent=1 // pred_check
      _
    $region47: #{regression_autoencoder.1} parent=1 // pred_check_branch
      %541 = sbr.rel (0) target = $region49
    $region48: #{regression_autoencoder.1} parent=1 // pred_region
      %s543 = ssub.s32 256, 256
      %544 = vsyncadd [#allocation4], %s543
      %s545 = sshll.u32 [#allocation10], 4
      %s546 = int_to_ptr.vmem [resolvable:$true] %s545
      %551 = dma.vmem_to_hbm [thread:$0]  %s546, 256, %s7, [#allocation4], 128, 128, 8
    $region49: #{regression_autoencoder.1} parent=1 // pred_fallthru
      _
    // Predicated region
    $region50: #{regression_autoencoder.1} parent=1 // pred_check
      _
    $region51: #{regression_autoencoder.1} parent=1 // pred_check_branch
      %553 = sbr.rel (0) target = $region53
    $region52: #{regression_autoencoder.1} parent=1 // pred_region
      _
    $region53: #{regression_autoencoder.1} parent=1 // pred_fallthru
      _
    // Predicated region
    $region54: #{regression_autoencoder.1} parent=1 // pred_check
      _
    $region55: #{regression_autoencoder.1} parent=1 // pred_check_branch
      %555 = sbr.rel (0) target = $region57
    $region56: #{regression_autoencoder.1} parent=1 // pred_region
      %556 = dma.done [#allocation4], 256
    $region57: #{regression_autoencoder.1} parent=1 // pred_fallthru
      _
    // Predicated region
    $region58: #{regression_autoencoder.1} parent=1 // pred_check
      _
    $region59: #{regression_autoencoder.1} parent=1 // pred_check_branch
      %558 = sbr.rel (0) target = $region61
    $region60: #{regression_autoencoder.1} parent=1 // pred_region
      _
    $region61: #{regression_autoencoder.1} parent=1 // pred_fallthru
      _
    %559 = vsyncpa [#allocation3], 1
    %560 = vsyncpa [#allocation6], 1
    %561 = vsyncpa [#allocation9], 1
    %562 = vsyncpa [#allocation4], 1

</llo_original>
